<compile_context>
chip_gen: v7x
topology: tpu7x:2x2x1
jax: 0.10.0
libtpu: 0.0.40
codegen_flags: <defaults>
</compile_context>

<pallas_src>
import functools

import jax
import jax.numpy as jnp
from jax.experimental import pallas as pl
from jax.experimental.pallas import tpu as pltpu  # noqa: F401  (TPU backend)

LANE = 128       # lane width (last-dim tile)
SUBLANE = 8      # f32 sublane tile


def _round_up(v, m):
    return (v + m - 1) // m * m


def _fused_ss_head_kernel(x_ref,
                          w1_ref, bias1_ref, beta11_ref, beta12_ref,
                          w2_ref, bias2_ref, beta21_ref, beta22_ref,
                          out_ref):
    """Two SS_Arch_Forward layers fused; alpha1/alpha2 pre-folded into w refs."""
    x = x_ref[...]                                                   # [Bp, N1]

    # ---- layer 1 ----
    # resp1 = (x*a1) @ W1.T * a2  ==  x @ W1'   (alphas folded into W1')
    h = jnp.dot(x, w1_ref[...], preferred_element_type=jnp.float32)  # [Bp, M1]
    h = h + jnp.sum(x * beta11_ref[...], axis=-1, keepdims=True)     # resp2
    h = h + jnp.sum(x, axis=-1, keepdims=True) * beta12_ref[...]     # resp3
    h = h + bias1_ref[...]
    # TODO(synk): dropout(p=0.25) is identity in eval mode; only ReLU applied.
    h = jnp.maximum(h, 0.0)

    # ---- layer 2 (output lanes padded to a 128 multiple, sliced outside) ----
    o = jnp.dot(h, w2_ref[...], preferred_element_type=jnp.float32)  # [Bp, M2p]
    o = o + jnp.sum(h * beta21_ref[...], axis=-1, keepdims=True)     # resp2
    o = o + jnp.sum(h, axis=-1, keepdims=True) * beta22_ref[...]     # resp3
    o = o + bias2_ref[...]
    out_ref[...] = o.astype(out_ref.dtype)


def _fused_head_call(x_pad, fp):
    """Single pallas_call over the whole (padded) batch; everything fits VMEM."""
    Bp, N1 = x_pad.shape
    M1 = fp["w1"].shape[1]
    M2p = fp["w2"].shape[1]
    return pl.pallas_call(
        _fused_ss_head_kernel,
        out_shape=jax.ShapeDtypeStruct((Bp, M2p), jnp.float32),
        grid=(1,),
        in_specs=[
            pl.BlockSpec((Bp, N1), lambda i: (0, 0)),    # x (padded batch)
            pl.BlockSpec((N1, M1), lambda i: (0, 0)),    # W1' (alphas folded)
            pl.BlockSpec((1, M1), lambda i: (0, 0)),     # bias1
            pl.BlockSpec((1, N1), lambda i: (0, 0)),     # beta1 (layer1, row form)
            pl.BlockSpec((1, M1), lambda i: (0, 0)),     # beta2 (layer1)
            pl.BlockSpec((M1, M2p), lambda i: (0, 0)),   # W2' (alphas folded, padded)
            pl.BlockSpec((1, M2p), lambda i: (0, 0)),    # bias2 (padded)
            pl.BlockSpec((1, M1), lambda i: (0, 0)),     # beta1 (layer2, row form)
            pl.BlockSpec((1, M2p), lambda i: (0, 0)),    # beta2 (layer2, padded)
        ],
        out_specs=pl.BlockSpec((Bp, M2p), lambda i: (0, 0)),
    )(x_pad, fp["w1"], fp["bias1"], fp["beta11"], fp["beta12"],
      fp["w2"], fp["bias2"], fp["beta21"], fp["beta22"])


def prepare_params(params):
    """One-time preprocessing: transpose weights, fold alpha1/alpha2 into them,
    reshape betas/bias into broadcastable rows, pad the final output dim to a
    multiple of 128 for lane-dense stores."""
    assert len(params) == 2, "fused head expects the 2-layer EEIL classifier"

    def fold(p):
        M, N = p["weight"].shape
        wT = (p["weight"].T
              * p["alpha1"].reshape(N, 1)
              * p["alpha2"].reshape(1, M)).astype(jnp.float32)       # [N, M]
        return (wT,
                p["bias"].reshape(1, M).astype(jnp.float32),
                p["beta1"].reshape(1, N).astype(jnp.float32),
                p["beta2"].reshape(1, M).astype(jnp.float32))

    w1, b1, be11, be12 = fold(params[0])
    w2, b2, be21, be22 = fold(params[1])

    M2 = w2.shape[1]
    M2p = _round_up(M2, LANE)
    pad = M2p - M2
    if pad:
        w2 = jnp.pad(w2, ((0, 0), (0, pad)))
        b2 = jnp.pad(b2, ((0, 0), (0, pad)))
        be22 = jnp.pad(be22, ((0, 0), (0, pad)))

    fused = dict(w1=w1, bias1=b1, beta11=be11, beta12=be12,
                 w2=w2, bias2=b2, beta21=be21, beta22=be22)
    return fused, M2


@functools.partial(jax.jit, static_argnames=("out_dim",))
def ss_model3_forward(x, fused_params, out_dim):
    """SS_Model3.forward(x, mode='f') in eval mode, fully fused + jitted."""
    resp = x.reshape(-1, 2048)
    B = resp.shape[0]
    Bp = _round_up(max(B, SUBLANE), SUBLANE)
    if Bp != B:
        resp = jnp.pad(resp, ((0, Bp - B), (0, 0)))
    out = _fused_head_call(resp, fused_params)
    return out[:B, :out_dim]


def init_params(key, layer_dims):
    """Deterministic synthetic params for each Linear + its Scale_Shift_Set."""
    params = []
    for (n_size, m_size) in layer_dims:
        key, kw, kb = jax.random.split(key, 3)
        weight = jax.random.normal(kw, (m_size, n_size), jnp.float32) * 0.02
        bias = jax.random.normal(kb, (m_size,), jnp.float32) * 0.01
        # Scale_Shift_Set __init__ fills: alpha1=1, alpha2=1, beta1=0, beta2=0
        alpha1 = jnp.ones((1, n_size), jnp.float32)
        alpha2 = jnp.ones((1, m_size), jnp.float32)
        beta1 = jnp.zeros((n_size, 1), jnp.float32)
        beta2 = jnp.zeros((1, m_size), jnp.float32)
        params.append(dict(weight=weight, bias=bias, alpha1=alpha1,
                           alpha2=alpha2, beta1=beta1, beta2=beta2))
    return params


def ss_model3_reference(x, params):
    """Pure-JAX reference of the same forward, for validation."""
    resp = x.reshape(-1, 2048)
    n_layers = len(params)
    for i, p in enumerate(params):
        resp1 = (resp * p["alpha1"]) @ p["weight"].T * p["alpha2"]
        resp2 = resp @ p["beta1"]
        resp3 = (resp @ jnp.ones((p["weight"].shape[1], 1), jnp.float32)) @ p["beta2"]
        resp = resp1 + resp2 + resp3 + p["bias"][None, :]
        if i < n_layers - 1:
            resp = jnp.maximum(resp, 0.0)   # dropout identity in eval
    return resp


if __name__ == "__main__":
    key = jax.random.PRNGKey(0)
    k_x, k_p = jax.random.split(key)

    # Classifier head over 2048-d features (the forward hard-codes view(-1, 2048)).
    batch = 2
    x = jax.random.normal(k_x, (batch, 2048), jnp.float32)

    # Two Linear layers in the base model: 2048 -> 128 -> 100 (Cifar100 classes).
    layer_dims = [(2048, 128), (128, 100)]   # (n_size, m_size) per layer
    params = init_params(k_p, layer_dims)

    # One-time parameter prep (transpose + fold alphas + pad output lanes).
    fused_params, out_dim = prepare_params(params)

    out = ss_model3_forward(x, fused_params, out_dim)
    out = jax.block_until_ready(out)

    ref = ss_model3_reference(x, params)
    assert out.shape == (batch, out_dim), out.shape
    assert jnp.allclose(out, ref, atol=1e-4, rtol=1e-4), \
        float(jnp.max(jnp.abs(out - ref)))

    print("KERNEL_OK")
</pallas_src>

<mosaic_0001>
module attributes {stable_mosaic.version = 11 : i64} {
  func.func @_fused_ss_head_kernel(%arg0: i32, %arg1: memref<8x2048xf32, #tpu.memory_space<vmem>>, %arg2: memref<2048x128xf32, #tpu.memory_space<vmem>>, %arg3: memref<1x128xf32, #tpu.memory_space<vmem>>, %arg4: memref<1x2048xf32, #tpu.memory_space<vmem>>, %arg5: memref<1x128xf32, #tpu.memory_space<vmem>>, %arg6: memref<128x128xf32, #tpu.memory_space<vmem>>, %arg7: memref<1x128xf32, #tpu.memory_space<vmem>>, %arg8: memref<1x128xf32, #tpu.memory_space<vmem>>, %arg9: memref<1x128xf32, #tpu.memory_space<vmem>>, %arg10: memref<8x128xf32, #tpu.memory_space<vmem>>) attributes {dimension_semantics = [#tpu.dimension_semantics<arbitrary>], iteration_bounds = array<i64: 1>, scalar_prefetch = 0 : i64, scratch_operands = 0 : i64, tpu.core_type = #tpu.core_type<tc>, window_params = [{pipeline_mode = #tpu.pipeline_mode<synchronous>, transform_indices = @transform_0, window_bounds = array<i64: 8, 2048>}, {pipeline_mode = #tpu.pipeline_mode<synchronous>, transform_indices = @transform_1, window_bounds = array<i64: 2048, 128>}, {pipeline_mode = #tpu.pipeline_mode<synchronous>, transform_indices = @transform_2, window_bounds = array<i64: 1, 128>}, {pipeline_mode = #tpu.pipeline_mode<synchronous>, transform_indices = @transform_3, window_bounds = array<i64: 1, 2048>}, {pipeline_mode = #tpu.pipeline_mode<synchronous>, transform_indices = @transform_4, window_bounds = array<i64: 1, 128>}, {pipeline_mode = #tpu.pipeline_mode<synchronous>, transform_indices = @transform_5, window_bounds = array<i64: 128, 128>}, {pipeline_mode = #tpu.pipeline_mode<synchronous>, transform_indices = @transform_6, window_bounds = array<i64: 1, 128>}, {pipeline_mode = #tpu.pipeline_mode<synchronous>, transform_indices = @transform_7, window_bounds = array<i64: 1, 128>}, {pipeline_mode = #tpu.pipeline_mode<synchronous>, transform_indices = @transform_8, window_bounds = array<i64: 1, 128>}, {pipeline_mode = #tpu.pipeline_mode<synchronous>, transform_indices = @transform_9, window_bounds = array<i64: 8, 128>}]} {
    %c0 = arith.constant 0 : index
    %c0_0 = arith.constant 0 : index
    %0 = vector.load %arg1[%c0, %c0_0] : memref<8x2048xf32, #tpu.memory_space<vmem>>, vector<8x2048xf32>
    %c0_1 = arith.constant 0 : index
    %c0_2 = arith.constant 0 : index
    %1 = vector.load %arg2[%c0_1, %c0_2] : memref<2048x128xf32, #tpu.memory_space<vmem>>, vector<2048x128xf32>
    %cst = arith.constant dense<0.000000e+00> : vector<8x128xf32>
    %2 = tpu.matmul %0, %1, %cst {dimension_numbers = #tpu.dot_dimension_numbers<[1], [0], [0], [1], [0, 0, 1, 1], [], []>} : vector<8x2048xf32>, vector<2048x128xf32>, vector<8x128xf32> -> vector<8x128xf32>
    %c0_3 = arith.constant 0 : index
    %c0_4 = arith.constant 0 : index
    %3 = vector.load %arg4[%c0_3, %c0_4] : memref<1x2048xf32, #tpu.memory_space<vmem>>, vector<1x2048xf32>
    %4 = vector.broadcast %3 : vector<1x2048xf32> to vector<8x2048xf32>
    %5 = arith.mulf %0, %4 : vector<8x2048xf32>
    %cst_5 = arith.constant dense<0.000000e+00> : vector<8xf32>
    %6 = vector.multi_reduction <add>, %5, %cst_5 [1] : vector<8x2048xf32> to vector<8xf32>
    %7 = vector.shape_cast %6 : vector<8xf32> to vector<8x1xf32>
    %8 = vector.broadcast %7 : vector<8x1xf32> to vector<8x128xf32>
    %9 = arith.addf %2, %8 : vector<8x128xf32>
    %cst_6 = arith.constant dense<0.000000e+00> : vector<8xf32>
    %10 = vector.multi_reduction <add>, %0, %cst_6 [1] : vector<8x2048xf32> to vector<8xf32>
    %11 = vector.shape_cast %10 : vector<8xf32> to vector<8x1xf32>
    %c0_7 = arith.constant 0 : index
    %c0_8 = arith.constant 0 : index
    %12 = vector.load %arg5[%c0_7, %c0_8] : memref<1x128xf32, #tpu.memory_space<vmem>>, vector<1x128xf32>
    %13 = vector.broadcast %11 : vector<8x1xf32> to vector<8x128xf32>
    %14 = vector.broadcast %12 : vector<1x128xf32> to vector<8x128xf32>
    %15 = arith.mulf %13, %14 : vector<8x128xf32>
    %16 = arith.addf %9, %15 : vector<8x128xf32>
    %c0_9 = arith.constant 0 : index
    %c0_10 = arith.constant 0 : index
    %17 = vector.load %arg3[%c0_9, %c0_10] : memref<1x128xf32, #tpu.memory_space<vmem>>, vector<1x128xf32>
    %18 = vector.broadcast %17 : vector<1x128xf32> to vector<8x128xf32>
    %19 = arith.addf %16, %18 : vector<8x128xf32>
    %cst_11 = arith.constant 0.000000e+00 : f32
    %20 = vector.broadcast %cst_11 : f32 to vector<8x128xf32>
    %21 = arith.maximumf %19, %20 : vector<8x128xf32>
    %c0_12 = arith.constant 0 : index
    %c0_13 = arith.constant 0 : index
    %22 = vector.load %arg6[%c0_12, %c0_13] : memref<128x128xf32, #tpu.memory_space<vmem>>, vector<128x128xf32>
    %cst_14 = arith.constant dense<0.000000e+00> : vector<8x128xf32>
    %23 = tpu.matmul %21, %22, %cst_14 {dimension_numbers = #tpu.dot_dimension_numbers<[1], [0], [0], [1], [0, 0, 1, 1], [], []>} : vector<8x128xf32>, vector<128x128xf32>, vector<8x128xf32> -> vector<8x128xf32>
    %c0_15 = arith.constant 0 : index
    %c0_16 = arith.constant 0 : index
    %24 = vector.load %arg8[%c0_15, %c0_16] : memref<1x128xf32, #tpu.memory_space<vmem>>, vector<1x128xf32>
    %25 = vector.broadcast %24 : vector<1x128xf32> to vector<8x128xf32>
    %26 = arith.mulf %21, %25 : vector<8x128xf32>
    %cst_17 = arith.constant dense<0.000000e+00> : vector<8xf32>
    %27 = vector.multi_reduction <add>, %26, %cst_17 [1] : vector<8x128xf32> to vector<8xf32>
    %28 = vector.shape_cast %27 : vector<8xf32> to vector<8x1xf32>
    %29 = vector.broadcast %28 : vector<8x1xf32> to vector<8x128xf32>
    %30 = arith.addf %23, %29 : vector<8x128xf32>
    %cst_18 = arith.constant dense<0.000000e+00> : vector<8xf32>
    %31 = vector.multi_reduction <add>, %21, %cst_18 [1] : vector<8x128xf32> to vector<8xf32>
    %32 = vector.shape_cast %31 : vector<8xf32> to vector<8x1xf32>
    %c0_19 = arith.constant 0 : index
    %c0_20 = arith.constant 0 : index
    %33 = vector.load %arg9[%c0_19, %c0_20] : memref<1x128xf32, #tpu.memory_space<vmem>>, vector<1x128xf32>
    %34 = vector.broadcast %32 : vector<8x1xf32> to vector<8x128xf32>
    %35 = vector.broadcast %33 : vector<1x128xf32> to vector<8x128xf32>
    %36 = arith.mulf %34, %35 : vector<8x128xf32>
    %37 = arith.addf %30, %36 : vector<8x128xf32>
    %c0_21 = arith.constant 0 : index
    %c0_22 = arith.constant 0 : index
    %38 = vector.load %arg7[%c0_21, %c0_22] : memref<1x128xf32, #tpu.memory_space<vmem>>, vector<1x128xf32>
    %39 = vector.broadcast %38 : vector<1x128xf32> to vector<8x128xf32>
    %40 = arith.addf %37, %39 : vector<8x128xf32>
    %c0_23 = arith.constant 0 : index
    %c0_24 = arith.constant 0 : index
    %41 = vector.load %arg10[%c0_23, %c0_24] : memref<8x128xf32, #tpu.memory_space<vmem>>, vector<8x128xf32>
    tpu.vector_store %arg10[%c0_23, %c0_24], %40 {strides = array<i32>} : memref<8x128xf32, #tpu.memory_space<vmem>>, vector<8x128xf32>,
    return
  }
  func.func @transform_0(%arg0: i32) -> (i32, i32) {
    %c0_i32 = arith.constant 0 : i32
    %c0_i32_0 = arith.constant 0 : i32
    %c0_i32_1 = arith.constant 0 : i32
    return %c0_i32, %c0_i32_0 : i32, i32
  }
  func.func @transform_1(%arg0: i32) -> (i32, i32) {
    %c0_i32 = arith.constant 0 : i32
    %c0_i32_0 = arith.constant 0 : i32
    %c0_i32_1 = arith.constant 0 : i32
    return %c0_i32, %c0_i32_0 : i32, i32
  }
  func.func @transform_2(%arg0: i32) -> (i32, i32) {
    %c0_i32 = arith.constant 0 : i32
    %c0_i32_0 = arith.constant 0 : i32
    %c0_i32_1 = arith.constant 0 : i32
    return %c0_i32, %c0_i32_0 : i32, i32
  }
  func.func @transform_3(%arg0: i32) -> (i32, i32) {
    %c0_i32 = arith.constant 0 : i32
    %c0_i32_0 = arith.constant 0 : i32
    %c0_i32_1 = arith.constant 0 : i32
    return %c0_i32, %c0_i32_0 : i32, i32
  }
  func.func @transform_4(%arg0: i32) -> (i32, i32) {
    %c0_i32 = arith.constant 0 : i32
    %c0_i32_0 = arith.constant 0 : i32
    %c0_i32_1 = arith.constant 0 : i32
    return %c0_i32, %c0_i32_0 : i32, i32
  }
  func.func @transform_5(%arg0: i32) -> (i32, i32) {
    %c0_i32 = arith.constant 0 : i32
    %c0_i32_0 = arith.constant 0 : i32
    %c0_i32_1 = arith.constant 0 : i32
    return %c0_i32, %c0_i32_0 : i32, i32
  }
  func.func @transform_6(%arg0: i32) -> (i32, i32) {
    %c0_i32 = arith.constant 0 : i32
    %c0_i32_0 = arith.constant 0 : i32
    %c0_i32_1 = arith.constant 0 : i32
    return %c0_i32, %c0_i32_0 : i32, i32
  }
  func.func @transform_7(%arg0: i32) -> (i32, i32) {
    %c0_i32 = arith.constant 0 : i32
    %c0_i32_0 = arith.constant 0 : i32
    %c0_i32_1 = arith.constant 0 : i32
    return %c0_i32, %c0_i32_0 : i32, i32
  }
  func.func @transform_8(%arg0: i32) -> (i32, i32) {
    %c0_i32 = arith.constant 0 : i32
    %c0_i32_0 = arith.constant 0 : i32
    %c0_i32_1 = arith.constant 0 : i32
    return %c0_i32, %c0_i32_0 : i32, i32
  }
  func.func @transform_9(%arg0: i32) -> (i32, i32) {
    %c0_i32 = arith.constant 0 : i32
    %c0_i32_0 = arith.constant 0 : i32
    %c0_i32_1 = arith.constant 0 : i32
    return %c0_i32, %c0_i32_0 : i32, i32
  }
}

</mosaic_0001>

<llo_original>
// kernel: ss_model3_forward.1
$region0: #{ss_model3_forward.1}
  #allocation0 [shape = 'u32[]', space=smem, size = 0x4, offset = 0x4, fixed_abs, tag = 'smem constant byte address 0x4 - core index']
  #allocation1 [shape = 'u32[144,128]{1,0:T(1,128)}', space=vmem, size = 0x12000, scoped, tag = 'internal scratch']
  %s0 = inlined_call_operand.vmem [shape: f32[8,2048], index: 0, kind: input, shape index: {}]
  %s1 = inlined_call_operand.hbm [shape: f32[2048,128], index: 1, kind: input, shape index: {}]
  %s2 = inlined_call_operand.vmem [shape: f32[1,128], index: 2, kind: input, shape index: {}]
  %s3 = inlined_call_operand.vmem [shape: f32[1,2048], index: 3, kind: input, shape index: {}]
  %s4 = inlined_call_operand.vmem [shape: f32[1,128], index: 4, kind: input, shape index: {}]
  %s5 = inlined_call_operand.vmem [shape: f32[128,128], index: 5, kind: input, shape index: {}]
  %s6 = inlined_call_operand.vmem [shape: f32[1,128], index: 6, kind: input, shape index: {}]
  %s7 = inlined_call_operand.vmem [shape: f32[1,128], index: 7, kind: input, shape index: {}]
  %s8 = inlined_call_operand.vmem [shape: f32[1,128], index: 8, kind: input, shape index: {}]
  %s9 = inlined_call_operand.vmem [shape: f32[8,128], index: 9, kind: output, shape index: {}]
  %s10 = sld [smem:[#allocation0]]
  $region50: #{ss_model3_forward.1} parent=0
    _
  %s12 = ssub.s32 1, %s10
  %s13 = scalar_select 0, %s12, %s10
  $region1: #{ss_model3_forward.1} parent=0
    #allocation2 [shape = 'u8[1048576]{0}', space=vmem, size = 0x100000, scoped, tag = 'input window, operand 1, single buffered']
    #allocation3 [shape = 's32[1]{0}', space=sflag, size = 0x4, scoped, tag = 'scoped memory for ss_model3_forward.1']
    %14 = vsyncpa [#allocation3], 0
    // Predicated region
    $region2: #{ss_model3_forward.1} parent=1 // pred_check
      _
    $region3: #{ss_model3_forward.1} parent=1 // pred_check_branch
      %16 = sbr.rel (0) target = $region5
    $region4: #{ss_model3_forward.1} parent=1 // pred_region
      _
    $region5: #{ss_model3_forward.1} parent=1 // pred_fallthru
      _
    // Predicated region
    $region6: #{ss_model3_forward.1} parent=1 // pred_check
      _
    $region7: #{ss_model3_forward.1} parent=1 // pred_check_branch
      %18 = sbr.rel (0) target = $region9
    $region8: #{ss_model3_forward.1} parent=1 // pred_region
      %s20 = ssub.s32 32768, 32768
      %21 = vsyncadd [#allocation3], %s20
      %s22 = sshll.u32 [#allocation2], 4
      %s23 = int_to_ptr.vmem [resolvable:$true] %s22
      %28 = dma.hbm_to_vmem [thread:$0]  %s1, 32768, %s23, [#allocation3], 128, 128, 8
    $region9: #{ss_model3_forward.1} parent=1 // pred_fallthru
      _
    // Predicated region
    $region10: #{ss_model3_forward.1} parent=1 // pred_check
      _
    $region11: #{ss_model3_forward.1} parent=1 // pred_check_branch
      %30 = sbr.rel (0) target = $region13
    $region12: #{ss_model3_forward.1} parent=1 // pred_region
      _
    $region13: #{ss_model3_forward.1} parent=1 // pred_fallthru
      _
    // Predicated region
    $region14: #{ss_model3_forward.1} parent=1 // pred_check
      _
    $region15: #{ss_model3_forward.1} parent=1 // pred_check_branch
      %32 = sbr.rel (0) target = $region17
    $region16: #{ss_model3_forward.1} parent=1 // pred_region
      _
    $region17: #{ss_model3_forward.1} parent=1 // pred_fallthru
      _
    // Predicated region
    $region18: #{ss_model3_forward.1} parent=1 // pred_check
      _
    $region19: #{ss_model3_forward.1} parent=1 // pred_check_branch
      %34 = sbr.rel (0) target = $region21
    $region20: #{ss_model3_forward.1} parent=1 // pred_region
      _
    $region21: #{ss_model3_forward.1} parent=1 // pred_fallthru
      _
    // Predicated region
    $region22: #{ss_model3_forward.1} parent=1 // pred_check
      _
    $region23: #{ss_model3_forward.1} parent=1 // pred_check_branch
      %36 = sbr.rel (0) target = $region25
    $region24: #{ss_model3_forward.1} parent=1 // pred_region
      _
    $region25: #{ss_model3_forward.1} parent=1 // pred_fallthru
      _
    // Predicated region
    $region26: #{ss_model3_forward.1} parent=1 // pred_check
      _
    $region27: #{ss_model3_forward.1} parent=1 // pred_check_branch
      %38 = sbr.rel (0) target = $region29
    $region28: #{ss_model3_forward.1} parent=1 // pred_region
      _
    $region29: #{ss_model3_forward.1} parent=1 // pred_fallthru
      _
    // Predicated region
    $region30: #{ss_model3_forward.1} parent=1 // pred_check
      _
    $region31: #{ss_model3_forward.1} parent=1 // pred_check_branch
      %40 = sbr.rel (0) target = $region33
    $region32: #{ss_model3_forward.1} parent=1 // pred_region
      _
    $region33: #{ss_model3_forward.1} parent=1 // pred_fallthru
      _
    // Predicated region
    $region34: #{ss_model3_forward.1} parent=1 // pred_check
      _
    $region35: #{ss_model3_forward.1} parent=1 // pred_check_branch
      %42 = sbr.rel (0) target = $region37
    $region36: #{ss_model3_forward.1} parent=1 // pred_region
      _
    $region37: #{ss_model3_forward.1} parent=1 // pred_fallthru
      _
    // Predicated region
    $region38: #{ss_model3_forward.1} parent=1 // pred_check
      _
    $region39: #{ss_model3_forward.1} parent=1 // pred_check_branch
      %44 = sbr.rel (0) target = $region41
    $region40: #{ss_model3_forward.1} parent=1 // pred_region
      %45 = dma.done [#allocation3], 32768
    $region41: #{ss_model3_forward.1} parent=1 // pred_fallthru
      _
    %v46 = vld [vmem:[%s0] sm:$0xff]
    %v47 = vld [vmem:[%s0 + $0x8] sm:$0xff]
    %v48 = vld [vmem:[%s0 + $0x10] sm:$0xff]
    %v49 = vld [vmem:[%s0 + $0x18] sm:$0xff]
    %v50 = vld [vmem:[%s0 + $0x20] sm:$0xff]
    %v51 = vld [vmem:[%s0 + $0x28] sm:$0xff]
    %v52 = vld [vmem:[%s0 + $0x30] sm:$0xff]
    %v53 = vld [vmem:[%s0 + $0x38] sm:$0xff]
    %v54 = vld [vmem:[%s0 + $0x40] sm:$0xff]
    %v55 = vld [vmem:[%s0 + $0x48] sm:$0xff]
    %v56 = vld [vmem:[%s0 + $0x50] sm:$0xff]
    %v57 = vld [vmem:[%s0 + $0x58] sm:$0xff]
    %v58 = vld [vmem:[%s0 + $0x60] sm:$0xff]
    %v59 = vld [vmem:[%s0 + $0x68] sm:$0xff]
    %v60 = vld [vmem:[%s0 + $0x70] sm:$0xff]
    %v61 = vld [vmem:[%s0 + $0x78] sm:$0xff]
    %v62 = vld [vmem:[#allocation2] sm:$0xff]
    %v63 = vld [vmem:[#allocation2 + $0x8] sm:$0xff]
    %v64 = vld [vmem:[#allocation2 + $0x10] sm:$0xff]
    %v65 = vld [vmem:[#allocation2 + $0x18] sm:$0xff]
    %v66 = vld [vmem:[#allocation2 + $0x20] sm:$0xff]
    %v67 = vld [vmem:[#allocation2 + $0x28] sm:$0xff]
    %v68 = vld [vmem:[#allocation2 + $0x30] sm:$0xff]
    %v69 = vld [vmem:[#allocation2 + $0x38] sm:$0xff]
    %v70 = vld [vmem:[#allocation2 + $0x40] sm:$0xff]
    %v71 = vld [vmem:[#allocation2 + $0x48] sm:$0xff]
    %v72 = vld [vmem:[#allocation2 + $0x50] sm:$0xff]
    %v73 = vld [vmem:[#allocation2 + $0x58] sm:$0xff]
    %v74 = vld [vmem:[#allocation2 + $0x60] sm:$0xff]
    %v75 = vld [vmem:[#allocation2 + $0x68] sm:$0xff]
    %v76 = vld [vmem:[#allocation2 + $0x70] sm:$0xff]
    %v77 = vld [vmem:[#allocation2 + $0x78] sm:$0xff]
    %v78 = vld [vmem:[#allocation2 + $0x80] sm:$0xff]
    %v79 = vld [vmem:[#allocation2 + $0x88] sm:$0xff]
    %v80 = vld [vmem:[#allocation2 + $0x90] sm:$0xff]
    %v81 = vld [vmem:[#allocation2 + $0x98] sm:$0xff]
    %v82 = vld [vmem:[#allocation2 + $0xa0] sm:$0xff]
    %v83 = vld [vmem:[#allocation2 + $0xa8] sm:$0xff]
    %v84 = vld [vmem:[#allocation2 + $0xb0] sm:$0xff]
    %v85 = vld [vmem:[#allocation2 + $0xb8] sm:$0xff]
    %v86 = vld [vmem:[#allocation2 + $0xc0] sm:$0xff]
    %v87 = vld [vmem:[#allocation2 + $0xc8] sm:$0xff]
    %v88 = vld [vmem:[#allocation2 + $0xd0] sm:$0xff]
    %v89 = vld [vmem:[#allocation2 + $0xd8] sm:$0xff]
    %v90 = vld [vmem:[#allocation2 + $0xe0] sm:$0xff]
    %v91 = vld [vmem:[#allocation2 + $0xe8] sm:$0xff]
    %v92 = vld [vmem:[#allocation2 + $0xf0] sm:$0xff]
    %v93 = vld [vmem:[#allocation2 + $0xf8] sm:$0xff]
    %v94 = vld [vmem:[#allocation2 + $0x100] sm:$0xff]
    %v95 = vld [vmem:[#allocation2 + $0x108] sm:$0xff]
    %v96 = vld [vmem:[#allocation2 + $0x110] sm:$0xff]
    %v97 = vld [vmem:[#allocation2 + $0x118] sm:$0xff]
    %v98 = vld [vmem:[#allocation2 + $0x120] sm:$0xff]
    %v99 = vld [vmem:[#allocation2 + $0x128] sm:$0xff]
    %v100 = vld [vmem:[#allocation2 + $0x130] sm:$0xff]
    %v101 = vld [vmem:[#allocation2 + $0x138] sm:$0xff]
    %v102 = vld [vmem:[#allocation2 + $0x140] sm:$0xff]
    %v103 = vld [vmem:[#allocation2 + $0x148] sm:$0xff]
    %v104 = vld [vmem:[#allocation2 + $0x150] sm:$0xff]
    %v105 = vld [vmem:[#allocation2 + $0x158] sm:$0xff]
    %v106 = vld [vmem:[#allocation2 + $0x160] sm:$0xff]
    %v107 = vld [vmem:[#allocation2 + $0x168] sm:$0xff]
    %v108 = vld [vmem:[#allocation2 + $0x170] sm:$0xff]
    %v109 = vld [vmem:[#allocation2 + $0x178] sm:$0xff]
    %v110 = vld [vmem:[#allocation2 + $0x180] sm:$0xff]
    %v111 = vld [vmem:[#allocation2 + $0x188] sm:$0xff]
    %v112 = vld [vmem:[#allocation2 + $0x190] sm:$0xff]
    %v113 = vld [vmem:[#allocation2 + $0x198] sm:$0xff]
    %v114 = vld [vmem:[#allocation2 + $0x1a0] sm:$0xff]
    %v115 = vld [vmem:[#allocation2 + $0x1a8] sm:$0xff]
    %v116 = vld [vmem:[#allocation2 + $0x1b0] sm:$0xff]
    %v117 = vld [vmem:[#allocation2 + $0x1b8] sm:$0xff]
    %v118 = vld [vmem:[#allocation2 + $0x1c0] sm:$0xff]
    %v119 = vld [vmem:[#allocation2 + $0x1c8] sm:$0xff]
    %v120 = vld [vmem:[#allocation2 + $0x1d0] sm:$0xff]
    %v121 = vld [vmem:[#allocation2 + $0x1d8] sm:$0xff]
    %v122 = vld [vmem:[#allocation2 + $0x1e0] sm:$0xff]
    %v123 = vld [vmem:[#allocation2 + $0x1e8] sm:$0xff]
    %v124 = vld [vmem:[#allocation2 + $0x1f0] sm:$0xff]
    %v125 = vld [vmem:[#allocation2 + $0x1f8] sm:$0xff]
    %v126 = vld [vmem:[#allocation2 + $0x200] sm:$0xff]
    %v127 = vld [vmem:[#allocation2 + $0x208] sm:$0xff]
    %v128 = vld [vmem:[#allocation2 + $0x210] sm:$0xff]
    %v129 = vld [vmem:[#allocation2 + $0x218] sm:$0xff]
    %v130 = vld [vmem:[#allocation2 + $0x220] sm:$0xff]
    %v131 = vld [vmem:[#allocation2 + $0x228] sm:$0xff]
    %v132 = vld [vmem:[#allocation2 + $0x230] sm:$0xff]
    %v133 = vld [vmem:[#allocation2 + $0x238] sm:$0xff]
    %v134 = vld [vmem:[#allocation2 + $0x240] sm:$0xff]
    %v135 = vld [vmem:[#allocation2 + $0x248] sm:$0xff]
    %v136 = vld [vmem:[#allocation2 + $0x250] sm:$0xff]
    %v137 = vld [vmem:[#allocation2 + $0x258] sm:$0xff]
    %v138 = vld [vmem:[#allocation2 + $0x260] sm:$0xff]
    %v139 = vld [vmem:[#allocation2 + $0x268] sm:$0xff]
    %v140 = vld [vmem:[#allocation2 + $0x270] sm:$0xff]
    %v141 = vld [vmem:[#allocation2 + $0x278] sm:$0xff]
    %v142 = vld [vmem:[#allocation2 + $0x280] sm:$0xff]
    %v143 = vld [vmem:[#allocation2 + $0x288] sm:$0xff]
    %v144 = vld [vmem:[#allocation2 + $0x290] sm:$0xff]
    %v145 = vld [vmem:[#allocation2 + $0x298] sm:$0xff]
    %v146 = vld [vmem:[#allocation2 + $0x2a0] sm:$0xff]
    %v147 = vld [vmem:[#allocation2 + $0x2a8] sm:$0xff]
    %v148 = vld [vmem:[#allocation2 + $0x2b0] sm:$0xff]
    %v149 = vld [vmem:[#allocation2 + $0x2b8] sm:$0xff]
    %v150 = vld [vmem:[#allocation2 + $0x2c0] sm:$0xff]
    %v151 = vld [vmem:[#allocation2 + $0x2c8] sm:$0xff]
    %v152 = vld [vmem:[#allocation2 + $0x2d0] sm:$0xff]
    %v153 = vld [vmem:[#allocation2 + $0x2d8] sm:$0xff]
    %v154 = vld [vmem:[#allocation2 + $0x2e0] sm:$0xff]
    %v155 = vld [vmem:[#allocation2 + $0x2e8] sm:$0xff]
    %v156 = vld [vmem:[#allocation2 + $0x2f0] sm:$0xff]
    %v157 = vld [vmem:[#allocation2 + $0x2f8] sm:$0xff]
    %v158 = vld [vmem:[#allocation2 + $0x300] sm:$0xff]
    %v159 = vld [vmem:[#allocation2 + $0x308] sm:$0xff]
    %v160 = vld [vmem:[#allocation2 + $0x310] sm:$0xff]
    %v161 = vld [vmem:[#allocation2 + $0x318] sm:$0xff]
    %v162 = vld [vmem:[#allocation2 + $0x320] sm:$0xff]
    %v163 = vld [vmem:[#allocation2 + $0x328] sm:$0xff]
    %v164 = vld [vmem:[#allocation2 + $0x330] sm:$0xff]
    %v165 = vld [vmem:[#allocation2 + $0x338] sm:$0xff]
    %v166 = vld [vmem:[#allocation2 + $0x340] sm:$0xff]
    %v167 = vld [vmem:[#allocation2 + $0x348] sm:$0xff]
    %v168 = vld [vmem:[#allocation2 + $0x350] sm:$0xff]
    %v169 = vld [vmem:[#allocation2 + $0x358] sm:$0xff]
    %v170 = vld [vmem:[#allocation2 + $0x360] sm:$0xff]
    %v171 = vld [vmem:[#allocation2 + $0x368] sm:$0xff]
    %v172 = vld [vmem:[#allocation2 + $0x370] sm:$0xff]
    %v173 = vld [vmem:[#allocation2 + $0x378] sm:$0xff]
    %v174 = vld [vmem:[#allocation2 + $0x380] sm:$0xff]
    %v175 = vld [vmem:[#allocation2 + $0x388] sm:$0xff]
    %v176 = vld [vmem:[#allocation2 + $0x390] sm:$0xff]
    %v177 = vld [vmem:[#allocation2 + $0x398] sm:$0xff]
    %v178 = vld [vmem:[#allocation2 + $0x3a0] sm:$0xff]
    %v179 = vld [vmem:[#allocation2 + $0x3a8] sm:$0xff]
    %v180 = vld [vmem:[#allocation2 + $0x3b0] sm:$0xff]
    %v181 = vld [vmem:[#allocation2 + $0x3b8] sm:$0xff]
    %v182 = vld [vmem:[#allocation2 + $0x3c0] sm:$0xff]
    %v183 = vld [vmem:[#allocation2 + $0x3c8] sm:$0xff]
    %v184 = vld [vmem:[#allocation2 + $0x3d0] sm:$0xff]
    %v185 = vld [vmem:[#allocation2 + $0x3d8] sm:$0xff]
    %v186 = vld [vmem:[#allocation2 + $0x3e0] sm:$0xff]
    %v187 = vld [vmem:[#allocation2 + $0x3e8] sm:$0xff]
    %v188 = vld [vmem:[#allocation2 + $0x3f0] sm:$0xff]
    %v189 = vld [vmem:[#allocation2 + $0x3f8] sm:$0xff]
    %v190 = vld [vmem:[#allocation2 + $0x400] sm:$0xff]
    %v191 = vld [vmem:[#allocation2 + $0x408] sm:$0xff]
    %v192 = vld [vmem:[#allocation2 + $0x410] sm:$0xff]
    %v193 = vld [vmem:[#allocation2 + $0x418] sm:$0xff]
    %v194 = vld [vmem:[#allocation2 + $0x420] sm:$0xff]
    %v195 = vld [vmem:[#allocation2 + $0x428] sm:$0xff]
    %v196 = vld [vmem:[#allocation2 + $0x430] sm:$0xff]
    %v197 = vld [vmem:[#allocation2 + $0x438] sm:$0xff]
    %v198 = vld [vmem:[#allocation2 + $0x440] sm:$0xff]
    %v199 = vld [vmem:[#allocation2 + $0x448] sm:$0xff]
    %v200 = vld [vmem:[#allocation2 + $0x450] sm:$0xff]
    %v201 = vld [vmem:[#allocation2 + $0x458] sm:$0xff]
    %v202 = vld [vmem:[#allocation2 + $0x460] sm:$0xff]
    %v203 = vld [vmem:[#allocation2 + $0x468] sm:$0xff]
    %v204 = vld [vmem:[#allocation2 + $0x470] sm:$0xff]
    %v205 = vld [vmem:[#allocation2 + $0x478] sm:$0xff]
    %v206 = vld [vmem:[#allocation2 + $0x480] sm:$0xff]
    %v207 = vld [vmem:[#allocation2 + $0x488] sm:$0xff]
    %v208 = vld [vmem:[#allocation2 + $0x490] sm:$0xff]
    %v209 = vld [vmem:[#allocation2 + $0x498] sm:$0xff]
    %v210 = vld [vmem:[#allocation2 + $0x4a0] sm:$0xff]
    %v211 = vld [vmem:[#allocation2 + $0x4a8] sm:$0xff]
    %v212 = vld [vmem:[#allocation2 + $0x4b0] sm:$0xff]
    %v213 = vld [vmem:[#allocation2 + $0x4b8] sm:$0xff]
    %v214 = vld [vmem:[#allocation2 + $0x4c0] sm:$0xff]
    %v215 = vld [vmem:[#allocation2 + $0x4c8] sm:$0xff]
    %v216 = vld [vmem:[#allocation2 + $0x4d0] sm:$0xff]
    %v217 = vld [vmem:[#allocation2 + $0x4d8] sm:$0xff]
    %v218 = vld [vmem:[#allocation2 + $0x4e0] sm:$0xff]
    %v219 = vld [vmem:[#allocation2 + $0x4e8] sm:$0xff]
    %v220 = vld [vmem:[#allocation2 + $0x4f0] sm:$0xff]
    %v221 = vld [vmem:[#allocation2 + $0x4f8] sm:$0xff]
    %v222 = vld [vmem:[#allocation2 + $0x500] sm:$0xff]
    %v223 = vld [vmem:[#allocation2 + $0x508] sm:$0xff]
    %v224 = vld [vmem:[#allocation2 + $0x510] sm:$0xff]
    %v225 = vld [vmem:[#allocation2 + $0x518] sm:$0xff]
    %v226 = vld [vmem:[#allocation2 + $0x520] sm:$0xff]
    %v227 = vld [vmem:[#allocation2 + $0x528] sm:$0xff]
    %v228 = vld [vmem:[#allocation2 + $0x530] sm:$0xff]
    %v229 = vld [vmem:[#allocation2 + $0x538] sm:$0xff]
    %v230 = vld [vmem:[#allocation2 + $0x540] sm:$0xff]
    %v231 = vld [vmem:[#allocation2 + $0x548] sm:$0xff]
    %v232 = vld [vmem:[#allocation2 + $0x550] sm:$0xff]
    %v233 = vld [vmem:[#allocation2 + $0x558] sm:$0xff]
    %v234 = vld [vmem:[#allocation2 + $0x560] sm:$0xff]
    %v235 = vld [vmem:[#allocation2 + $0x568] sm:$0xff]
    %v236 = vld [vmem:[#allocation2 + $0x570] sm:$0xff]
    %v237 = vld [vmem:[#allocation2 + $0x578] sm:$0xff]
    %v238 = vld [vmem:[#allocation2 + $0x580] sm:$0xff]
    %v239 = vld [vmem:[#allocation2 + $0x588] sm:$0xff]
    %v240 = vld [vmem:[#allocation2 + $0x590] sm:$0xff]
    %v241 = vld [vmem:[#allocation2 + $0x598] sm:$0xff]
    %v242 = vld [vmem:[#allocation2 + $0x5a0] sm:$0xff]
    %v243 = vld [vmem:[#allocation2 + $0x5a8] sm:$0xff]
    %v244 = vld [vmem:[#allocation2 + $0x5b0] sm:$0xff]
    %v245 = vld [vmem:[#allocation2 + $0x5b8] sm:$0xff]
    %v246 = vld [vmem:[#allocation2 + $0x5c0] sm:$0xff]
    %v247 = vld [vmem:[#allocation2 + $0x5c8] sm:$0xff]
    %v248 = vld [vmem:[#allocation2 + $0x5d0] sm:$0xff]
    %v249 = vld [vmem:[#allocation2 + $0x5d8] sm:$0xff]
    %v250 = vld [vmem:[#allocation2 + $0x5e0] sm:$0xff]
    %v251 = vld [vmem:[#allocation2 + $0x5e8] sm:$0xff]
    %v252 = vld [vmem:[#allocation2 + $0x5f0] sm:$0xff]
    %v253 = vld [vmem:[#allocation2 + $0x5f8] sm:$0xff]
    %v254 = vld [vmem:[#allocation2 + $0x600] sm:$0xff]
    %v255 = vld [vmem:[#allocation2 + $0x608] sm:$0xff]
    %v256 = vld [vmem:[#allocation2 + $0x610] sm:$0xff]
    %v257 = vld [vmem:[#allocation2 + $0x618] sm:$0xff]
    %v258 = vld [vmem:[#allocation2 + $0x620] sm:$0xff]
    %v259 = vld [vmem:[#allocation2 + $0x628] sm:$0xff]
    %v260 = vld [vmem:[#allocation2 + $0x630] sm:$0xff]
    %v261 = vld [vmem:[#allocation2 + $0x638] sm:$0xff]
    %v262 = vld [vmem:[#allocation2 + $0x640] sm:$0xff]
    %v263 = vld [vmem:[#allocation2 + $0x648] sm:$0xff]
    %v264 = vld [vmem:[#allocation2 + $0x650] sm:$0xff]
    %v265 = vld [vmem:[#allocation2 + $0x658] sm:$0xff]
    %v266 = vld [vmem:[#allocation2 + $0x660] sm:$0xff]
    %v267 = vld [vmem:[#allocation2 + $0x668] sm:$0xff]
    %v268 = vld [vmem:[#allocation2 + $0x670] sm:$0xff]
    %v269 = vld [vmem:[#allocation2 + $0x678] sm:$0xff]
    %v270 = vld [vmem:[#allocation2 + $0x680] sm:$0xff]
    %v271 = vld [vmem:[#allocation2 + $0x688] sm:$0xff]
    %v272 = vld [vmem:[#allocation2 + $0x690] sm:$0xff]
    %v273 = vld [vmem:[#allocation2 + $0x698] sm:$0xff]
    %v274 = vld [vmem:[#allocation2 + $0x6a0] sm:$0xff]
    %v275 = vld [vmem:[#allocation2 + $0x6a8] sm:$0xff]
    %v276 = vld [vmem:[#allocation2 + $0x6b0] sm:$0xff]
    %v277 = vld [vmem:[#allocation2 + $0x6b8] sm:$0xff]
    %v278 = vld [vmem:[#allocation2 + $0x6c0] sm:$0xff]
    %v279 = vld [vmem:[#allocation2 + $0x6c8] sm:$0xff]
    %v280 = vld [vmem:[#allocation2 + $0x6d0] sm:$0xff]
    %v281 = vld [vmem:[#allocation2 + $0x6d8] sm:$0xff]
    %v282 = vld [vmem:[#allocation2 + $0x6e0] sm:$0xff]
    %v283 = vld [vmem:[#allocation2 + $0x6e8] sm:$0xff]
    %v284 = vld [vmem:[#allocation2 + $0x6f0] sm:$0xff]
    %v285 = vld [vmem:[#allocation2 + $0x6f8] sm:$0xff]
    %v286 = vld [vmem:[#allocation2 + $0x700] sm:$0xff]
    %v287 = vld [vmem:[#allocation2 + $0x708] sm:$0xff]
    %v288 = vld [vmem:[#allocation2 + $0x710] sm:$0xff]
    %v289 = vld [vmem:[#allocation2 + $0x718] sm:$0xff]
    %v290 = vld [vmem:[#allocation2 + $0x720] sm:$0xff]
    %v291 = vld [vmem:[#allocation2 + $0x728] sm:$0xff]
    %v292 = vld [vmem:[#allocation2 + $0x730] sm:$0xff]
    %v293 = vld [vmem:[#allocation2 + $0x738] sm:$0xff]
    %v294 = vld [vmem:[#allocation2 + $0x740] sm:$0xff]
    %v295 = vld [vmem:[#allocation2 + $0x748] sm:$0xff]
    %v296 = vld [vmem:[#allocation2 + $0x750] sm:$0xff]
    %v297 = vld [vmem:[#allocation2 + $0x758] sm:$0xff]
    %v298 = vld [vmem:[#allocation2 + $0x760] sm:$0xff]
    %v299 = vld [vmem:[#allocation2 + $0x768] sm:$0xff]
    %v300 = vld [vmem:[#allocation2 + $0x770] sm:$0xff]
    %v301 = vld [vmem:[#allocation2 + $0x778] sm:$0xff]
    %v302 = vld [vmem:[#allocation2 + $0x780] sm:$0xff]
    %v303 = vld [vmem:[#allocation2 + $0x788] sm:$0xff]
    %v304 = vld [vmem:[#allocation2 + $0x790] sm:$0xff]
    %v305 = vld [vmem:[#allocation2 + $0x798] sm:$0xff]
    %v306 = vld [vmem:[#allocation2 + $0x7a0] sm:$0xff]
    %v307 = vld [vmem:[#allocation2 + $0x7a8] sm:$0xff]
    %v308 = vld [vmem:[#allocation2 + $0x7b0] sm:$0xff]
    %v309 = vld [vmem:[#allocation2 + $0x7b8] sm:$0xff]
    %v310 = vld [vmem:[#allocation2 + $0x7c0] sm:$0xff]
    %v311 = vld [vmem:[#allocation2 + $0x7c8] sm:$0xff]
    %v312 = vld [vmem:[#allocation2 + $0x7d0] sm:$0xff]
    %v313 = vld [vmem:[#allocation2 + $0x7d8] sm:$0xff]
    %v314 = vld [vmem:[#allocation2 + $0x7e0] sm:$0xff]
    %v315 = vld [vmem:[#allocation2 + $0x7e8] sm:$0xff]
    %v316 = vld [vmem:[#allocation2 + $0x7f0] sm:$0xff]
    %v317 = vld [vmem:[#allocation2 + $0x7f8] sm:$0xff]
    %v318 = vld [vmem:[%s3] sm:$0xff]
    %v319 = vld [vmem:[%s3 + $0x8] sm:$0xff]
    %v322 = vlaneseq
    %v323 = vshrl.u32 %v322, 7
    %v324 = vsub.s32 0, %v323
    %v325 = vrot.slane %v318, %v324
    %v326 = vlaneseq
    %v327 = vshrl.u32 %v326, 7
    %v328 = vsub.s32 1, %v327
    %v329 = vrot.slane %v318, %v328
    %v330 = vlaneseq
    %v331 = vshrl.u32 %v330, 7
    %v332 = vsub.s32 2, %v331
    %v333 = vrot.slane %v318, %v332
    %v334 = vlaneseq
    %v335 = vshrl.u32 %v334, 7
    %v336 = vsub.s32 3, %v335
    %v337 = vrot.slane %v318, %v336
    %v338 = vlaneseq
    %v339 = vshrl.u32 %v338, 7
    %v340 = vsub.s32 4, %v339
    %v341 = vrot.slane %v318, %v340
    %v342 = vlaneseq
    %v343 = vshrl.u32 %v342, 7
    %v344 = vsub.s32 5, %v343
    %v345 = vrot.slane %v318, %v344
    %v346 = vlaneseq
    %v347 = vshrl.u32 %v346, 7
    %v348 = vsub.s32 6, %v347
    %v349 = vrot.slane %v318, %v348
    %v350 = vlaneseq
    %v351 = vshrl.u32 %v350, 7
    %v352 = vsub.s32 7, %v351
    %v353 = vrot.slane %v318, %v352
    %v354 = vlaneseq
    %v355 = vshrl.u32 %v354, 7
    %v356 = vsub.s32 0, %v355
    %v357 = vrot.slane %v319, %v356
    %v358 = vlaneseq
    %v359 = vshrl.u32 %v358, 7
    %v360 = vsub.s32 1, %v359
    %v361 = vrot.slane %v319, %v360
    %v362 = vlaneseq
    %v363 = vshrl.u32 %v362, 7
    %v364 = vsub.s32 2, %v363
    %v365 = vrot.slane %v319, %v364
    %v366 = vlaneseq
    %v367 = vshrl.u32 %v366, 7
    %v368 = vsub.s32 3, %v367
    %v369 = vrot.slane %v319, %v368
    %v370 = vlaneseq
    %v371 = vshrl.u32 %v370, 7
    %v372 = vsub.s32 4, %v371
    %v373 = vrot.slane %v319, %v372
    %v374 = vlaneseq
    %v375 = vshrl.u32 %v374, 7
    %v376 = vsub.s32 5, %v375
    %v377 = vrot.slane %v319, %v376
    %v378 = vlaneseq
    %v379 = vshrl.u32 %v378, 7
    %v380 = vsub.s32 6, %v379
    %v381 = vrot.slane %v319, %v380
    %v382 = vlaneseq
    %v383 = vshrl.u32 %v382, 7
    %v384 = vsub.s32 7, %v383
    %v385 = vrot.slane %v319, %v384
    %v402 = vmul.f32 %v46, %v325
    %v403 = vmul.f32 %v47, %v329
    %v404 = vmul.f32 %v48, %v333
    %v405 = vmul.f32 %v49, %v337
    %v406 = vmul.f32 %v50, %v341
    %v407 = vmul.f32 %v51, %v345
    %v408 = vmul.f32 %v52, %v349
    %v409 = vmul.f32 %v53, %v353
    %v410 = vmul.f32 %v54, %v357
    %v411 = vmul.f32 %v55, %v361
    %v412 = vmul.f32 %v56, %v365
    %v413 = vmul.f32 %v57, %v369
    %v414 = vmul.f32 %v58, %v373
    %v415 = vmul.f32 %v59, %v377
    %v416 = vmul.f32 %v60, %v381
    %v417 = vmul.f32 %v61, %v385
    %v418 = vadd.f32 %v402, %v403
    %v419 = vadd.f32 %v418, %v404
    %v420 = vadd.f32 %v419, %v405
    %v421 = vadd.f32 %v420, %v406
    %v422 = vadd.f32 %v421, %v407
    %v423 = vadd.f32 %v422, %v408
    %v424 = vadd.f32 %v423, %v409
    %v425 = vadd.f32 %v424, %v410
    %v426 = vadd.f32 %v425, %v411
    %v427 = vadd.f32 %v426, %v412
    %v428 = vadd.f32 %v427, %v413
    %v429 = vadd.f32 %v428, %v414
    %v430 = vadd.f32 %v429, %v415
    %v431 = vadd.f32 %v430, %v416
    %v432 = vadd.f32 %v431, %v417
    %433 = vadd.xlane.f32.xlu0 %v432
    %v434 = vpop.xlane.xlu0 %433
    %435 = vmatprep.subr.mxu0 0.0
    %436 = vmatpush1.msra.mxu0 %v62
    %437 = vmatprep.subr.mxu0 0.0
    %438 = vmatpush1.msra.mxu0 %v63
    %439 = vmatprep.subr.mxu0 0.0
    %440 = vmatpush1.msra.mxu0 %v64
    %441 = vmatprep.subr.mxu0 0.0
    %442 = vmatpush1.msra.mxu0 %v65
    %443 = vmatprep.subr.mxu0 0.0
    %444 = vmatpush1.msra.mxu0 %v66
    %445 = vmatprep.subr.mxu0 0.0
    %446 = vmatpush1.msra.mxu0 %v67
    %447 = vmatprep.subr.mxu0 0.0
    %448 = vmatpush1.msra.mxu0 %v68
    %449 = vmatprep.subr.mxu0 0.0
    %450 = vmatpush1.msra.mxu0 %v69
    %451 = vmatprep.subr.mxu0 0.0
    %452 = vmatpush1.msra.mxu0 %v70
    %453 = vmatprep.subr.mxu0 0.0
    %454 = vmatpush1.msra.mxu0 %v71
    %455 = vmatprep.subr.mxu0 0.0
    %456 = vmatpush1.msra.mxu0 %v72
    %457 = vmatprep.subr.mxu0 0.0
    %458 = vmatpush1.msra.mxu0 %v73
    %459 = vmatprep.subr.mxu0 0.0
    %460 = vmatpush1.msra.mxu0 %v74
    %461 = vmatprep.subr.mxu0 0.0
    %462 = vmatpush1.msra.mxu0 %v75
    %463 = vmatprep.subr.mxu0 0.0
    %464 = vmatpush1.msra.mxu0 %v76
    %465 = vmatprep.subr.mxu0 0.0
    %466 = vmatpush1.msra.mxu0 %v77
    %467 = vmatprep.subr.mxu0 0.0
    %468 = vmatpush1.msra.mxu0 %v78
    %469 = vmatprep.subr.mxu0 0.0
    %470 = vmatpush1.msra.mxu0 %v79
    %471 = vmatprep.subr.mxu0 0.0
    %472 = vmatpush1.msra.mxu0 %v80
    %473 = vmatprep.subr.mxu0 0.0
    %474 = vmatpush1.msra.mxu0 %v81
    %475 = vmatprep.subr.mxu0 0.0
    %476 = vmatpush1.msra.mxu0 %v82
    %477 = vmatprep.subr.mxu0 0.0
    %478 = vmatpush1.msra.mxu0 %v83
    %479 = vmatprep.subr.mxu0 0.0
    %480 = vmatpush1.msra.mxu0 %v84
    %481 = vmatprep.subr.mxu0 0.0
    %482 = vmatpush1.msra.mxu0 %v85
    %483 = vmatprep.subr.mxu0 0.0
    %484 = vmatpush1.msra.mxu0 %v86
    %485 = vmatprep.subr.mxu0 0.0
    %486 = vmatpush1.msra.mxu0 %v87
    %487 = vmatprep.subr.mxu0 0.0
    %488 = vmatpush1.msra.mxu0 %v88
    %489 = vmatprep.subr.mxu0 0.0
    %490 = vmatpush1.msra.mxu0 %v89
    %491 = vmatprep.subr.mxu0 0.0
    %492 = vmatpush1.msra.mxu0 %v90
    %493 = vmatprep.subr.mxu0 0.0
    %494 = vmatpush1.msra.mxu0 %v91
    %495 = vmatprep.subr.mxu0 0.0
    %496 = vmatpush1.msra.mxu0 %v92
    %497 = vmatprep.subr.mxu0 0.0
    %498 = vmatpush1.msra.mxu0 %v93
    %499 = vmatprep.mubr.f32.mxu0 %v47
    %500 = vmatmul.mubr.f32.gmra.mrb[0].mxu0 %v46
    %v501 = vpop.f32.mrb[0].mxu0
    %v502 = vadd.f32 %v434, %v501
    %v503 = vpop.f32.mrb[0].mxu0
    %504 = vdwg.mxu0
    %505 = vmatprep.subr.mxu0 0.0
    %506 = vmatpush1.msra.mxu0 %v94
    %507 = vmatprep.subr.mxu0 0.0
    %508 = vmatpush1.msra.mxu0 %v95
    %509 = vmatprep.subr.mxu0 0.0
    %510 = vmatpush1.msra.mxu0 %v96
    %511 = vmatprep.subr.mxu0 0.0
    %512 = vmatpush1.msra.mxu0 %v97
    %513 = vmatprep.subr.mxu0 0.0
    %514 = vmatpush1.msra.mxu0 %v98
    %515 = vmatprep.subr.mxu0 0.0
    %516 = vmatpush1.msra.mxu0 %v99
    %517 = vmatprep.subr.mxu0 0.0
    %518 = vmatpush1.msra.mxu0 %v100
    %519 = vmatprep.subr.mxu0 0.0
    %520 = vmatpush1.msra.mxu0 %v101
    %521 = vmatprep.subr.mxu0 0.0
    %522 = vmatpush1.msra.mxu0 %v102
    %523 = vmatprep.subr.mxu0 0.0
    %524 = vmatpush1.msra.mxu0 %v103
    %525 = vmatprep.subr.mxu0 0.0
    %526 = vmatpush1.msra.mxu0 %v104
    %527 = vmatprep.subr.mxu0 0.0
    %528 = vmatpush1.msra.mxu0 %v105
    %529 = vmatprep.subr.mxu0 0.0
    %530 = vmatpush1.msra.mxu0 %v106
    %531 = vmatprep.subr.mxu0 0.0
    %532 = vmatpush1.msra.mxu0 %v107
    %533 = vmatprep.subr.mxu0 0.0
    %534 = vmatpush1.msra.mxu0 %v108
    %535 = vmatprep.subr.mxu0 0.0
    %536 = vmatpush1.msra.mxu0 %v109
    %537 = vmatprep.subr.mxu0 0.0
    %538 = vmatpush1.msra.mxu0 %v110
    %539 = vmatprep.subr.mxu0 0.0
    %540 = vmatpush1.msra.mxu0 %v111
    %541 = vmatprep.subr.mxu0 0.0
    %542 = vmatpush1.msra.mxu0 %v112
    %543 = vmatprep.subr.mxu0 0.0
    %544 = vmatpush1.msra.mxu0 %v113
    %545 = vmatprep.subr.mxu0 0.0
    %546 = vmatpush1.msra.mxu0 %v114
    %547 = vmatprep.subr.mxu0 0.0
    %548 = vmatpush1.msra.mxu0 %v115
    %549 = vmatprep.subr.mxu0 0.0
    %550 = vmatpush1.msra.mxu0 %v116
    %551 = vmatprep.subr.mxu0 0.0
    %552 = vmatpush1.msra.mxu0 %v117
    %553 = vmatprep.subr.mxu0 0.0
    %554 = vmatpush1.msra.mxu0 %v118
    %555 = vmatprep.subr.mxu0 0.0
    %556 = vmatpush1.msra.mxu0 %v119
    %557 = vmatprep.subr.mxu0 0.0
    %558 = vmatpush1.msra.mxu0 %v120
    %559 = vmatprep.subr.mxu0 0.0
    %560 = vmatpush1.msra.mxu0 %v121
    %561 = vmatprep.subr.mxu0 0.0
    %562 = vmatpush1.msra.mxu0 %v122
    %563 = vmatprep.subr.mxu0 0.0
    %564 = vmatpush1.msra.mxu0 %v123
    %565 = vmatprep.subr.mxu0 0.0
    %566 = vmatpush1.msra.mxu0 %v124
    %567 = vmatprep.subr.mxu0 0.0
    %568 = vmatpush1.msra.mxu0 %v125
    %569 = vmatprep.mubr.f32.mxu0 %v49
    %570 = vmatmul.mubr.f32.gmra.mrb[0].mxu0 %v48
    %v571 = vpop.f32.mrb[0].mxu0
    %v572 = vadd.f32 %v502, %v571
    %v573 = vpop.f32.mrb[0].mxu0
    %574 = vdwg.mxu0
    %575 = vmatprep.subr.mxu0 0.0
    %576 = vmatpush1.msra.mxu0 %v126
    %577 = vmatprep.subr.mxu0 0.0
    %578 = vmatpush1.msra.mxu0 %v127
    %579 = vmatprep.subr.mxu0 0.0
    %580 = vmatpush1.msra.mxu0 %v128
    %581 = vmatprep.subr.mxu0 0.0
    %582 = vmatpush1.msra.mxu0 %v129
    %583 = vmatprep.subr.mxu0 0.0
    %584 = vmatpush1.msra.mxu0 %v130
    %585 = vmatprep.subr.mxu0 0.0
    %586 = vmatpush1.msra.mxu0 %v131
    %587 = vmatprep.subr.mxu0 0.0
    %588 = vmatpush1.msra.mxu0 %v132
    %589 = vmatprep.subr.mxu0 0.0
    %590 = vmatpush1.msra.mxu0 %v133
    %591 = vmatprep.subr.mxu0 0.0
    %592 = vmatpush1.msra.mxu0 %v134
    %593 = vmatprep.subr.mxu0 0.0
    %594 = vmatpush1.msra.mxu0 %v135
    %595 = vmatprep.subr.mxu0 0.0
    %596 = vmatpush1.msra.mxu0 %v136
    %597 = vmatprep.subr.mxu0 0.0
    %598 = vmatpush1.msra.mxu0 %v137
    %599 = vmatprep.subr.mxu0 0.0
    %600 = vmatpush1.msra.mxu0 %v138
    %601 = vmatprep.subr.mxu0 0.0
    %602 = vmatpush1.msra.mxu0 %v139
    %603 = vmatprep.subr.mxu0 0.0
    %604 = vmatpush1.msra.mxu0 %v140
    %605 = vmatprep.subr.mxu0 0.0
    %606 = vmatpush1.msra.mxu0 %v141
    %607 = vmatprep.subr.mxu0 0.0
    %608 = vmatpush1.msra.mxu0 %v142
    %609 = vmatprep.subr.mxu0 0.0
    %610 = vmatpush1.msra.mxu0 %v143
    %611 = vmatprep.subr.mxu0 0.0
    %612 = vmatpush1.msra.mxu0 %v144
    %613 = vmatprep.subr.mxu0 0.0
    %614 = vmatpush1.msra.mxu0 %v145
    %615 = vmatprep.subr.mxu0 0.0
    %616 = vmatpush1.msra.mxu0 %v146
    %617 = vmatprep.subr.mxu0 0.0
    %618 = vmatpush1.msra.mxu0 %v147
    %619 = vmatprep.subr.mxu0 0.0
    %620 = vmatpush1.msra.mxu0 %v148
    %621 = vmatprep.subr.mxu0 0.0
    %622 = vmatpush1.msra.mxu0 %v149
    %623 = vmatprep.subr.mxu0 0.0
    %624 = vmatpush1.msra.mxu0 %v150
    %625 = vmatprep.subr.mxu0 0.0
    %626 = vmatpush1.msra.mxu0 %v151
    %627 = vmatprep.subr.mxu0 0.0
    %628 = vmatpush1.msra.mxu0 %v152
    %629 = vmatprep.subr.mxu0 0.0
    %630 = vmatpush1.msra.mxu0 %v153
    %631 = vmatprep.subr.mxu0 0.0
    %632 = vmatpush1.msra.mxu0 %v154
    %633 = vmatprep.subr.mxu0 0.0
    %634 = vmatpush1.msra.mxu0 %v155
    %635 = vmatprep.subr.mxu0 0.0
    %636 = vmatpush1.msra.mxu0 %v156
    %637 = vmatprep.subr.mxu0 0.0
    %638 = vmatpush1.msra.mxu0 %v157
    %639 = vmatprep.mubr.f32.mxu0 %v51
    %640 = vmatmul.mubr.f32.gmra.mrb[0].mxu0 %v50
    %v641 = vpop.f32.mrb[0].mxu0
    %v642 = vadd.f32 %v572, %v641
    %v643 = vpop.f32.mrb[0].mxu0
    %644 = vdwg.mxu0
    %645 = vmatprep.subr.mxu0 0.0
    %646 = vmatpush1.msra.mxu0 %v158
    %647 = vmatprep.subr.mxu0 0.0
    %648 = vmatpush1.msra.mxu0 %v159
    %649 = vmatprep.subr.mxu0 0.0
    %650 = vmatpush1.msra.mxu0 %v160
    %651 = vmatprep.subr.mxu0 0.0
    %652 = vmatpush1.msra.mxu0 %v161
    %653 = vmatprep.subr.mxu0 0.0
    %654 = vmatpush1.msra.mxu0 %v162
    %655 = vmatprep.subr.mxu0 0.0
    %656 = vmatpush1.msra.mxu0 %v163
    %657 = vmatprep.subr.mxu0 0.0
    %658 = vmatpush1.msra.mxu0 %v164
    %659 = vmatprep.subr.mxu0 0.0
    %660 = vmatpush1.msra.mxu0 %v165
    %661 = vmatprep.subr.mxu0 0.0
    %662 = vmatpush1.msra.mxu0 %v166
    %663 = vmatprep.subr.mxu0 0.0
    %664 = vmatpush1.msra.mxu0 %v167
    %665 = vmatprep.subr.mxu0 0.0
    %666 = vmatpush1.msra.mxu0 %v168
    %667 = vmatprep.subr.mxu0 0.0
    %668 = vmatpush1.msra.mxu0 %v169
    %669 = vmatprep.subr.mxu0 0.0
    %670 = vmatpush1.msra.mxu0 %v170
    %671 = vmatprep.subr.mxu0 0.0
    %672 = vmatpush1.msra.mxu0 %v171
    %673 = vmatprep.subr.mxu0 0.0
    %674 = vmatpush1.msra.mxu0 %v172
    %675 = vmatprep.subr.mxu0 0.0
    %676 = vmatpush1.msra.mxu0 %v173
    %677 = vmatprep.subr.mxu0 0.0
    %678 = vmatpush1.msra.mxu0 %v174
    %679 = vmatprep.subr.mxu0 0.0
    %680 = vmatpush1.msra.mxu0 %v175
    %681 = vmatprep.subr.mxu0 0.0
    %682 = vmatpush1.msra.mxu0 %v176
    %683 = vmatprep.subr.mxu0 0.0
    %684 = vmatpush1.msra.mxu0 %v177
    %685 = vmatprep.subr.mxu0 0.0
    %686 = vmatpush1.msra.mxu0 %v178
    %687 = vmatprep.subr.mxu0 0.0
    %688 = vmatpush1.msra.mxu0 %v179
    %689 = vmatprep.subr.mxu0 0.0
    %690 = vmatpush1.msra.mxu0 %v180
    %691 = vmatprep.subr.mxu0 0.0
    %692 = vmatpush1.msra.mxu0 %v181
    %693 = vmatprep.subr.mxu0 0.0
    %694 = vmatpush1.msra.mxu0 %v182
    %695 = vmatprep.subr.mxu0 0.0
    %696 = vmatpush1.msra.mxu0 %v183
    %697 = vmatprep.subr.mxu0 0.0
    %698 = vmatpush1.msra.mxu0 %v184
    %699 = vmatprep.subr.mxu0 0.0
    %700 = vmatpush1.msra.mxu0 %v185
    %701 = vmatprep.subr.mxu0 0.0
    %702 = vmatpush1.msra.mxu0 %v186
    %703 = vmatprep.subr.mxu0 0.0
    %704 = vmatpush1.msra.mxu0 %v187
    %705 = vmatprep.subr.mxu0 0.0
    %706 = vmatpush1.msra.mxu0 %v188
    %707 = vmatprep.subr.mxu0 0.0
    %708 = vmatpush1.msra.mxu0 %v189
    %709 = vmatprep.mubr.f32.mxu0 %v53
    %710 = vmatmul.mubr.f32.gmra.mrb[0].mxu0 %v52
    %v711 = vpop.f32.mrb[0].mxu0
    %v712 = vadd.f32 %v642, %v711
    %v713 = vpop.f32.mrb[0].mxu0
    %714 = vdwg.mxu0
    %715 = vmatprep.subr.mxu0 0.0
    %716 = vmatpush1.msra.mxu0 %v190
    %717 = vmatprep.subr.mxu0 0.0
    %718 = vmatpush1.msra.mxu0 %v191
    %719 = vmatprep.subr.mxu0 0.0
    %720 = vmatpush1.msra.mxu0 %v192
    %721 = vmatprep.subr.mxu0 0.0
    %722 = vmatpush1.msra.mxu0 %v193
    %723 = vmatprep.subr.mxu0 0.0
    %724 = vmatpush1.msra.mxu0 %v194
    %725 = vmatprep.subr.mxu0 0.0
    %726 = vmatpush1.msra.mxu0 %v195
    %727 = vmatprep.subr.mxu0 0.0
    %728 = vmatpush1.msra.mxu0 %v196
    %729 = vmatprep.subr.mxu0 0.0
    %730 = vmatpush1.msra.mxu0 %v197
    %731 = vmatprep.subr.mxu0 0.0
    %732 = vmatpush1.msra.mxu0 %v198
    %733 = vmatprep.subr.mxu0 0.0
    %734 = vmatpush1.msra.mxu0 %v199
    %735 = vmatprep.subr.mxu0 0.0
    %736 = vmatpush1.msra.mxu0 %v200
    %737 = vmatprep.subr.mxu0 0.0
    %738 = vmatpush1.msra.mxu0 %v201
    %739 = vmatprep.subr.mxu0 0.0
    %740 = vmatpush1.msra.mxu0 %v202
    %741 = vmatprep.subr.mxu0 0.0
    %742 = vmatpush1.msra.mxu0 %v203
    %743 = vmatprep.subr.mxu0 0.0
    %744 = vmatpush1.msra.mxu0 %v204
    %745 = vmatprep.subr.mxu0 0.0
    %746 = vmatpush1.msra.mxu0 %v205
    %747 = vmatprep.subr.mxu0 0.0
    %748 = vmatpush1.msra.mxu0 %v206
    %749 = vmatprep.subr.mxu0 0.0
    %750 = vmatpush1.msra.mxu0 %v207
    %751 = vmatprep.subr.mxu0 0.0
    %752 = vmatpush1.msra.mxu0 %v208
    %753 = vmatprep.subr.mxu0 0.0
    %754 = vmatpush1.msra.mxu0 %v209
    %755 = vmatprep.subr.mxu0 0.0
    %756 = vmatpush1.msra.mxu0 %v210
    %757 = vmatprep.subr.mxu0 0.0
    %758 = vmatpush1.msra.mxu0 %v211
    %759 = vmatprep.subr.mxu0 0.0
    %760 = vmatpush1.msra.mxu0 %v212
    %761 = vmatprep.subr.mxu0 0.0
    %762 = vmatpush1.msra.mxu0 %v213
    %763 = vmatprep.subr.mxu0 0.0
    %764 = vmatpush1.msra.mxu0 %v214
    %765 = vmatprep.subr.mxu0 0.0
    %766 = vmatpush1.msra.mxu0 %v215
    %767 = vmatprep.subr.mxu0 0.0
    %768 = vmatpush1.msra.mxu0 %v216
    %769 = vmatprep.subr.mxu0 0.0
    %770 = vmatpush1.msra.mxu0 %v217
    %771 = vmatprep.subr.mxu0 0.0
    %772 = vmatpush1.msra.mxu0 %v218
    %773 = vmatprep.subr.mxu0 0.0
    %774 = vmatpush1.msra.mxu0 %v219
    %775 = vmatprep.subr.mxu0 0.0
    %776 = vmatpush1.msra.mxu0 %v220
    %777 = vmatprep.subr.mxu0 0.0
    %778 = vmatpush1.msra.mxu0 %v221
    %779 = vmatprep.mubr.f32.mxu0 %v55
    %780 = vmatmul.mubr.f32.gmra.mrb[0].mxu0 %v54
    %v781 = vpop.f32.mrb[0].mxu0
    %v782 = vadd.f32 %v712, %v781
    %v783 = vpop.f32.mrb[0].mxu0
    %784 = vdwg.mxu0
    %785 = vmatprep.subr.mxu0 0.0
    %786 = vmatpush1.msra.mxu0 %v222
    %787 = vmatprep.subr.mxu0 0.0
    %788 = vmatpush1.msra.mxu0 %v223
    %789 = vmatprep.subr.mxu0 0.0
    %790 = vmatpush1.msra.mxu0 %v224
    %791 = vmatprep.subr.mxu0 0.0
    %792 = vmatpush1.msra.mxu0 %v225
    %793 = vmatprep.subr.mxu0 0.0
    %794 = vmatpush1.msra.mxu0 %v226
    %795 = vmatprep.subr.mxu0 0.0
    %796 = vmatpush1.msra.mxu0 %v227
    %797 = vmatprep.subr.mxu0 0.0
    %798 = vmatpush1.msra.mxu0 %v228
    %799 = vmatprep.subr.mxu0 0.0
    %800 = vmatpush1.msra.mxu0 %v229
    %801 = vmatprep.subr.mxu0 0.0
    %802 = vmatpush1.msra.mxu0 %v230
    %803 = vmatprep.subr.mxu0 0.0
    %804 = vmatpush1.msra.mxu0 %v231
    %805 = vmatprep.subr.mxu0 0.0
    %806 = vmatpush1.msra.mxu0 %v232
    %807 = vmatprep.subr.mxu0 0.0
    %808 = vmatpush1.msra.mxu0 %v233
    %809 = vmatprep.subr.mxu0 0.0
    %810 = vmatpush1.msra.mxu0 %v234
    %811 = vmatprep.subr.mxu0 0.0
    %812 = vmatpush1.msra.mxu0 %v235
    %813 = vmatprep.subr.mxu0 0.0
    %814 = vmatpush1.msra.mxu0 %v236
    %815 = vmatprep.subr.mxu0 0.0
    %816 = vmatpush1.msra.mxu0 %v237
    %817 = vmatprep.subr.mxu0 0.0
    %818 = vmatpush1.msra.mxu0 %v238
    %819 = vmatprep.subr.mxu0 0.0
    %820 = vmatpush1.msra.mxu0 %v239
    %821 = vmatprep.subr.mxu0 0.0
    %822 = vmatpush1.msra.mxu0 %v240
    %823 = vmatprep.subr.mxu0 0.0
    %824 = vmatpush1.msra.mxu0 %v241
    %825 = vmatprep.subr.mxu0 0.0
    %826 = vmatpush1.msra.mxu0 %v242
    %827 = vmatprep.subr.mxu0 0.0
    %828 = vmatpush1.msra.mxu0 %v243
    %829 = vmatprep.subr.mxu0 0.0
    %830 = vmatpush1.msra.mxu0 %v244
    %831 = vmatprep.subr.mxu0 0.0
    %832 = vmatpush1.msra.mxu0 %v245
    %833 = vmatprep.subr.mxu0 0.0
    %834 = vmatpush1.msra.mxu0 %v246
    %835 = vmatprep.subr.mxu0 0.0
    %836 = vmatpush1.msra.mxu0 %v247
    %837 = vmatprep.subr.mxu0 0.0
    %838 = vmatpush1.msra.mxu0 %v248
    %839 = vmatprep.subr.mxu0 0.0
    %840 = vmatpush1.msra.mxu0 %v249
    %841 = vmatprep.subr.mxu0 0.0
    %842 = vmatpush1.msra.mxu0 %v250
    %843 = vmatprep.subr.mxu0 0.0
    %844 = vmatpush1.msra.mxu0 %v251
    %845 = vmatprep.subr.mxu0 0.0
    %846 = vmatpush1.msra.mxu0 %v252
    %847 = vmatprep.subr.mxu0 0.0
    %848 = vmatpush1.msra.mxu0 %v253
    %849 = vmatprep.mubr.f32.mxu0 %v57
    %850 = vmatmul.mubr.f32.gmra.mrb[0].mxu0 %v56
    %v851 = vpop.f32.mrb[0].mxu0
    %v852 = vadd.f32 %v782, %v851
    %v853 = vpop.f32.mrb[0].mxu0
    %854 = vdwg.mxu0
    %855 = vmatprep.subr.mxu0 0.0
    %856 = vmatpush1.msra.mxu0 %v254
    %857 = vmatprep.subr.mxu0 0.0
    %858 = vmatpush1.msra.mxu0 %v255
    %859 = vmatprep.subr.mxu0 0.0
    %860 = vmatpush1.msra.mxu0 %v256
    %861 = vmatprep.subr.mxu0 0.0
    %862 = vmatpush1.msra.mxu0 %v257
    %863 = vmatprep.subr.mxu0 0.0
    %864 = vmatpush1.msra.mxu0 %v258
    %865 = vmatprep.subr.mxu0 0.0
    %866 = vmatpush1.msra.mxu0 %v259
    %867 = vmatprep.subr.mxu0 0.0
    %868 = vmatpush1.msra.mxu0 %v260
    %869 = vmatprep.subr.mxu0 0.0
    %870 = vmatpush1.msra.mxu0 %v261
    %871 = vmatprep.subr.mxu0 0.0
    %872 = vmatpush1.msra.mxu0 %v262
    %873 = vmatprep.subr.mxu0 0.0
    %874 = vmatpush1.msra.mxu0 %v263
    %875 = vmatprep.subr.mxu0 0.0
    %876 = vmatpush1.msra.mxu0 %v264
    %877 = vmatprep.subr.mxu0 0.0
    %878 = vmatpush1.msra.mxu0 %v265
    %879 = vmatprep.subr.mxu0 0.0
    %880 = vmatpush1.msra.mxu0 %v266
    %881 = vmatprep.subr.mxu0 0.0
    %882 = vmatpush1.msra.mxu0 %v267
    %883 = vmatprep.subr.mxu0 0.0
    %884 = vmatpush1.msra.mxu0 %v268
    %885 = vmatprep.subr.mxu0 0.0
    %886 = vmatpush1.msra.mxu0 %v269
    %887 = vmatprep.subr.mxu0 0.0
    %888 = vmatpush1.msra.mxu0 %v270
    %889 = vmatprep.subr.mxu0 0.0
    %890 = vmatpush1.msra.mxu0 %v271
    %891 = vmatprep.subr.mxu0 0.0
    %892 = vmatpush1.msra.mxu0 %v272
    %893 = vmatprep.subr.mxu0 0.0
    %894 = vmatpush1.msra.mxu0 %v273
    %895 = vmatprep.subr.mxu0 0.0
    %896 = vmatpush1.msra.mxu0 %v274
    %897 = vmatprep.subr.mxu0 0.0
    %898 = vmatpush1.msra.mxu0 %v275
    %899 = vmatprep.subr.mxu0 0.0
    %900 = vmatpush1.msra.mxu0 %v276
    %901 = vmatprep.subr.mxu0 0.0
    %902 = vmatpush1.msra.mxu0 %v277
    %903 = vmatprep.subr.mxu0 0.0
    %904 = vmatpush1.msra.mxu0 %v278
    %905 = vmatprep.subr.mxu0 0.0
    %906 = vmatpush1.msra.mxu0 %v279
    %907 = vmatprep.subr.mxu0 0.0
    %908 = vmatpush1.msra.mxu0 %v280
    %909 = vmatprep.subr.mxu0 0.0
    %910 = vmatpush1.msra.mxu0 %v281
    %911 = vmatprep.subr.mxu0 0.0
    %912 = vmatpush1.msra.mxu0 %v282
    %913 = vmatprep.subr.mxu0 0.0
    %914 = vmatpush1.msra.mxu0 %v283
    %915 = vmatprep.subr.mxu0 0.0
    %916 = vmatpush1.msra.mxu0 %v284
    %917 = vmatprep.subr.mxu0 0.0
    %918 = vmatpush1.msra.mxu0 %v285
    %919 = vmatprep.mubr.f32.mxu0 %v59
    %920 = vmatmul.mubr.f32.gmra.mrb[0].mxu0 %v58
    %v921 = vpop.f32.mrb[0].mxu0
    %v922 = vadd.f32 %v852, %v921
    %v923 = vpop.f32.mrb[0].mxu0
    %924 = vdwg.mxu0
    %925 = vmatprep.subr.mxu0 0.0
    %926 = vmatpush1.msra.mxu0 %v286
    %927 = vmatprep.subr.mxu0 0.0
    %928 = vmatpush1.msra.mxu0 %v287
    %929 = vmatprep.subr.mxu0 0.0
    %930 = vmatpush1.msra.mxu0 %v288
    %931 = vmatprep.subr.mxu0 0.0
    %932 = vmatpush1.msra.mxu0 %v289
    %933 = vmatprep.subr.mxu0 0.0
    %934 = vmatpush1.msra.mxu0 %v290
    %935 = vmatprep.subr.mxu0 0.0
    %936 = vmatpush1.msra.mxu0 %v291
    %937 = vmatprep.subr.mxu0 0.0
    %938 = vmatpush1.msra.mxu0 %v292
    %939 = vmatprep.subr.mxu0 0.0
    %940 = vmatpush1.msra.mxu0 %v293
    %941 = vmatprep.subr.mxu0 0.0
    %942 = vmatpush1.msra.mxu0 %v294
    %943 = vmatprep.subr.mxu0 0.0
    %944 = vmatpush1.msra.mxu0 %v295
    %945 = vmatprep.subr.mxu0 0.0
    %946 = vmatpush1.msra.mxu0 %v296
    %947 = vmatprep.subr.mxu0 0.0
    %948 = vmatpush1.msra.mxu0 %v297
    %949 = vmatprep.subr.mxu0 0.0
    %950 = vmatpush1.msra.mxu0 %v298
    %951 = vmatprep.subr.mxu0 0.0
    %952 = vmatpush1.msra.mxu0 %v299
    %953 = vmatprep.subr.mxu0 0.0
    %954 = vmatpush1.msra.mxu0 %v300
    %955 = vmatprep.subr.mxu0 0.0
    %956 = vmatpush1.msra.mxu0 %v301
    %957 = vmatprep.subr.mxu0 0.0
    %958 = vmatpush1.msra.mxu0 %v302
    %959 = vmatprep.subr.mxu0 0.0
    %960 = vmatpush1.msra.mxu0 %v303
    %961 = vmatprep.subr.mxu0 0.0
    %962 = vmatpush1.msra.mxu0 %v304
    %963 = vmatprep.subr.mxu0 0.0
    %964 = vmatpush1.msra.mxu0 %v305
    %965 = vmatprep.subr.mxu0 0.0
    %966 = vmatpush1.msra.mxu0 %v306
    %967 = vmatprep.subr.mxu0 0.0
    %968 = vmatpush1.msra.mxu0 %v307
    %969 = vmatprep.subr.mxu0 0.0
    %970 = vmatpush1.msra.mxu0 %v308
    %971 = vmatprep.subr.mxu0 0.0
    %972 = vmatpush1.msra.mxu0 %v309
    %973 = vmatprep.subr.mxu0 0.0
    %974 = vmatpush1.msra.mxu0 %v310
    %975 = vmatprep.subr.mxu0 0.0
    %976 = vmatpush1.msra.mxu0 %v311
    %977 = vmatprep.subr.mxu0 0.0
    %978 = vmatpush1.msra.mxu0 %v312
    %979 = vmatprep.subr.mxu0 0.0
    %980 = vmatpush1.msra.mxu0 %v313
    %981 = vmatprep.subr.mxu0 0.0
    %982 = vmatpush1.msra.mxu0 %v314
    %983 = vmatprep.subr.mxu0 0.0
    %984 = vmatpush1.msra.mxu0 %v315
    %985 = vmatprep.subr.mxu0 0.0
    %986 = vmatpush1.msra.mxu0 %v316
    %987 = vmatprep.subr.mxu0 0.0
    %988 = vmatpush1.msra.mxu0 %v317
    %989 = vmatprep.mubr.f32.mxu0 %v61
    %990 = vmatmul.mubr.f32.gmra.mrb[0].mxu0 %v60
    %v991 = vpop.f32.mrb[0].mxu0
    %v992 = vadd.f32 %v922, %v991
    %v993 = vpop.f32.mrb[0].mxu0
    %994 = vdwg.mxu0
    %v995 = vadd.f32 %v46, %v47
    %v996 = vadd.f32 %v995, %v48
    %v997 = vadd.f32 %v996, %v49
    %v998 = vadd.f32 %v997, %v50
    %v999 = vadd.f32 %v998, %v51
    %v1000 = vadd.f32 %v999, %v52
    %v1001 = vadd.f32 %v1000, %v53
    %v1002 = vadd.f32 %v1001, %v54
    %v1003 = vadd.f32 %v1002, %v55
    %v1004 = vadd.f32 %v1003, %v56
    %v1005 = vadd.f32 %v1004, %v57
    %v1006 = vadd.f32 %v1005, %v58
    %v1007 = vadd.f32 %v1006, %v59
    %v1008 = vadd.f32 %v1007, %v60
    %v1009 = vadd.f32 %v1008, %v61
    %1010 = vadd.xlane.f32.xlu0 %v1009
    %v1011 = vpop.xlane.xlu0 %1010
    %v1012 = vld [vmem:[%s4] sm:$0x1]
    %v1014 = vlaneseq
    %v1015 = vshrl.u32 %v1014, 7
    %v1016 = vsub.s32 0, %v1015
    %v1017 = vrot.slane %v1012, %v1016
    %v1019 = vmul.f32 %v1011, %v1017
    %v1020 = vadd.f32 %v992, %v1019
    %v1021 = vld [vmem:[%s2] sm:$0x1]
    %v1023 = vlaneseq
    %v1024 = vshrl.u32 %v1023, 7
    %v1025 = vsub.s32 0, %v1024
    %v1026 = vrot.slane %v1021, %v1025
    %v1028 = vadd.f32 %v1020, %v1026
    %v1029 = vmax.f32 %v1028, 0.0
    %v1030 = vld [vmem:[%s5] sm:$0xff]
    %v1031 = vld [vmem:[%s5 + $0x8] sm:$0xff]
    %v1032 = vld [vmem:[%s5 + $0x10] sm:$0xff]
    %v1033 = vld [vmem:[%s5 + $0x18] sm:$0xff]
    %v1034 = vld [vmem:[%s5 + $0x20] sm:$0xff]
    %v1035 = vld [vmem:[%s5 + $0x28] sm:$0xff]
    %v1036 = vld [vmem:[%s5 + $0x30] sm:$0xff]
    %v1037 = vld [vmem:[%s5 + $0x38] sm:$0xff]
    %v1038 = vld [vmem:[%s5 + $0x40] sm:$0xff]
    %v1039 = vld [vmem:[%s5 + $0x48] sm:$0xff]
    %v1040 = vld [vmem:[%s5 + $0x50] sm:$0xff]
    %v1041 = vld [vmem:[%s5 + $0x58] sm:$0xff]
    %v1042 = vld [vmem:[%s5 + $0x60] sm:$0xff]
    %v1043 = vld [vmem:[%s5 + $0x68] sm:$0xff]
    %v1044 = vld [vmem:[%s5 + $0x70] sm:$0xff]
    %v1045 = vld [vmem:[%s5 + $0x78] sm:$0xff]
    %v1046 = vld [vmem:[%s7] sm:$0x1]
    %v1048 = vlaneseq
    %v1049 = vshrl.u32 %v1048, 7
    %v1050 = vsub.s32 0, %v1049
    %v1051 = vrot.slane %v1046, %v1050
    %v1053 = vmul.f32 %v1029, %v1051
    %1054 = vadd.xlane.f32.xlu0 %v1053
    %v1055 = vpop.xlane.xlu0 %1054
    %1056 = vmatprep.subr.mxu0 0.0
    %1057 = vmatpush1.msra.mxu0 %v1030
    %1058 = vmatprep.subr.mxu0 0.0
    %1059 = vmatpush1.msra.mxu0 %v1031
    %1060 = vmatprep.subr.mxu0 0.0
    %1061 = vmatpush1.msra.mxu0 %v1032
    %1062 = vmatprep.subr.mxu0 0.0
    %1063 = vmatpush1.msra.mxu0 %v1033
    %1064 = vmatprep.subr.mxu0 0.0
    %1065 = vmatpush1.msra.mxu0 %v1034
    %1066 = vmatprep.subr.mxu0 0.0
    %1067 = vmatpush1.msra.mxu0 %v1035
    %1068 = vmatprep.subr.mxu0 0.0
    %1069 = vmatpush1.msra.mxu0 %v1036
    %1070 = vmatprep.subr.mxu0 0.0
    %1071 = vmatpush1.msra.mxu0 %v1037
    %1072 = vmatprep.subr.mxu0 0.0
    %1073 = vmatpush1.msra.mxu0 %v1038
    %1074 = vmatprep.subr.mxu0 0.0
    %1075 = vmatpush1.msra.mxu0 %v1039
    %1076 = vmatprep.subr.mxu0 0.0
    %1077 = vmatpush1.msra.mxu0 %v1040
    %1078 = vmatprep.subr.mxu0 0.0
    %1079 = vmatpush1.msra.mxu0 %v1041
    %1080 = vmatprep.subr.mxu0 0.0
    %1081 = vmatpush1.msra.mxu0 %v1042
    %1082 = vmatprep.subr.mxu0 0.0
    %1083 = vmatpush1.msra.mxu0 %v1043
    %1084 = vmatprep.subr.mxu0 0.0
    %1085 = vmatpush1.msra.mxu0 %v1044
    %1086 = vmatprep.subr.mxu0 0.0
    %1087 = vmatpush1.msra.mxu0 %v1045
    %1088 = vmatprep.subr.mxu0 0.0
    %1089 = vmatpush1.msra.mxu0 0.0
    %1090 = vmatprep.subr.mxu0 0.0
    %1091 = vmatpush1.msra.mxu0 0.0
    %1092 = vmatprep.subr.mxu0 0.0
    %1093 = vmatpush1.msra.mxu0 0.0
    %1094 = vmatprep.subr.mxu0 0.0
    %1095 = vmatpush1.msra.mxu0 0.0
    %1096 = vmatprep.subr.mxu0 0.0
    %1097 = vmatpush1.msra.mxu0 0.0
    %1098 = vmatprep.subr.mxu0 0.0
    %1099 = vmatpush1.msra.mxu0 0.0
    %1100 = vmatprep.subr.mxu0 0.0
    %1101 = vmatpush1.msra.mxu0 0.0
    %1102 = vmatprep.subr.mxu0 0.0
    %1103 = vmatpush1.msra.mxu0 0.0
    %1104 = vmatprep.subr.mxu0 0.0
    %1105 = vmatpush1.msra.mxu0 0.0
    %1106 = vmatprep.subr.mxu0 0.0
    %1107 = vmatpush1.msra.mxu0 0.0
    %1108 = vmatprep.subr.mxu0 0.0
    %1109 = vmatpush1.msra.mxu0 0.0
    %1110 = vmatprep.subr.mxu0 0.0
    %1111 = vmatpush1.msra.mxu0 0.0
    %1112 = vmatprep.subr.mxu0 0.0
    %1113 = vmatpush1.msra.mxu0 0.0
    %1114 = vmatprep.subr.mxu0 0.0
    %1115 = vmatpush1.msra.mxu0 0.0
    %1116 = vmatprep.subr.mxu0 0.0
    %1117 = vmatpush1.msra.mxu0 0.0
    %1118 = vmatprep.subr.mxu0 0.0
    %1119 = vmatpush1.msra.mxu0 0.0
    %1120 = vmatprep.mubr.f32.mxu0 0.0
    %1121 = vmatmul.mubr.f32.gmra.mrb[0].mxu0 %v1029
    %v1122 = vpop.f32.mrb[0].mxu0
    %v1123 = vadd.f32 %v1055, %v1122
    %v1124 = vpop.f32.mrb[0].mxu0
    %1125 = vdwg.mxu0
    %1126 = vadd.xlane.f32.xlu0 %v1029
    %v1127 = vpop.xlane.xlu0 %1126
    %v1128 = vld [vmem:[%s8] sm:$0x1]
    %v1130 = vlaneseq
    %v1131 = vshrl.u32 %v1130, 7
    %v1132 = vsub.s32 0, %v1131
    %v1133 = vrot.slane %v1128, %v1132
    %v1135 = vmul.f32 %v1127, %v1133
    %v1136 = vadd.f32 %v1123, %v1135
    %v1137 = vld [vmem:[%s6] sm:$0x1]
    %v1139 = vlaneseq
    %v1140 = vshrl.u32 %v1139, 7
    %v1141 = vsub.s32 0, %v1140
    %v1142 = vrot.slane %v1137, %v1141
    %v1144 = vadd.f32 %v1136, %v1142
    %1145 = vst [vmem:[%s9] sm:$0xff] %v1144
    // Predicated region
    $region42: #{ss_model3_forward.1} parent=1 // pred_check
      _
    $region43: #{ss_model3_forward.1} parent=1 // pred_check_branch
      %1147 = sbr.rel (0) target = $region45
    $region44: #{ss_model3_forward.1} parent=1 // pred_region
      _
    $region45: #{ss_model3_forward.1} parent=1 // pred_fallthru
      _
    // Predicated region
    $region46: #{ss_model3_forward.1} parent=1 // pred_check
      _
    $region47: #{ss_model3_forward.1} parent=1 // pred_check_branch
      %1149 = sbr.rel (0) target = $region49
    $region48: #{ss_model3_forward.1} parent=1 // pred_region
      _
    $region49: #{ss_model3_forward.1} parent=1 // pred_fallthru
      _
    %1150 = vsyncpa [#allocation3], 1

</llo_original>
